<compile_context>
chip_gen: v7x
topology: tpu7x:2x2x1
jax: 0.10.0
libtpu: 0.0.40
codegen_flags: <defaults>
</compile_context>

<pallas_src>
import functools
import math

import jax
import jax.numpy as jnp
from jax.experimental import pallas as pl
from jax.experimental.pallas import tpu as pltpu

_NEG_INF = -1e30  # finite "-inf" to avoid inf-inf NaNs in online softmax


def _round_up(x: int, m: int) -> int:
    return (x + m - 1) // m * m


# ---------------------------------------------------------------------------
# Tiled matmul kernel (used for wq / wk / wv / wo, PyTorch nn.Linear, bias=False)
# ---------------------------------------------------------------------------
def _linear_kernel(x_ref, w_ref, o_ref, acc_ref):
    @pl.when(pl.program_id(2) == 0)
    def _():
        acc_ref[...] = jnp.zeros_like(acc_ref)

    acc_ref[...] += jnp.dot(x_ref[...], w_ref[...],
                            preferred_element_type=jnp.float32)

    @pl.when(pl.program_id(2) == pl.num_programs(2) - 1)
    def _():
        o_ref[...] = acc_ref[...].astype(o_ref.dtype)


def linear(x, w, *, tm=256, tn=512, tk=512):
    """y = x @ w.T, with w in PyTorch [out_features, in_features] layout."""
    *lead, K = x.shape
    N, K2 = w.shape
    assert K2 == K
    rows = math.prod(lead) if lead else 1
    x2 = x.reshape(rows, K)
    wt = w.T  # [K, N]

    # M tiling (sublane axis): multiples of 8.
    if rows <= tm:
        tm_ = _round_up(rows, 8)
        mp = tm_
    else:
        tm_ = tm
        mp = _round_up(rows, tm_)
    # K tiling (lane axis of x): full dim if small, else lane-aligned tiles.
    if K <= tk:
        tk_, kp = K, K
    else:
        tk_, kp = tk, _round_up(K, tk)
    # N tiling (lane axis of w / out).
    if N <= tn:
        tn_, np_ = N, N
    else:
        tn_, np_ = tn, _round_up(N, tn)

    if (mp, kp) != (rows, K):
        x2 = jnp.pad(x2, ((0, mp - rows), (0, kp - K)))
    if (kp, np_) != (K, N):
        wt = jnp.pad(wt, ((0, kp - K), (0, np_ - N)))

    grid = (mp // tm_, np_ // tn_, kp // tk_)
    out = pl.pallas_call(
        _linear_kernel,
        out_shape=jax.ShapeDtypeStruct((mp, np_), x.dtype),
        grid_spec=pltpu.PrefetchScalarGridSpec(
            num_scalar_prefetch=0,
            grid=grid,
            in_specs=[
                pl.BlockSpec((tm_, tk_), lambda i, j, kk: (i, kk)),
                pl.BlockSpec((tk_, tn_), lambda i, j, kk: (kk, j)),
            ],
            out_specs=pl.BlockSpec((tm_, tn_), lambda i, j, kk: (i, j)),
            scratch_shapes=[pltpu.VMEM((tm_, tn_), jnp.float32)],
        ),
        compiler_params=pltpu.CompilerParams(
            dimension_semantics=("parallel", "parallel", "arbitrary"),
        ),
    )(x2, wt)
    out = out[:rows, :N]
    return out.reshape(*lead, N)


# ---------------------------------------------------------------------------
# Flash-attention (causal) kernel — F.scaled_dot_product_attention(is_causal=True)
# ---------------------------------------------------------------------------
def _flash_kernel(q_ref, k_ref, v_ref, o_ref, m_sc, l_sc, acc_sc, *,
                  scale, block_q, block_kv):
    qi = pl.program_id(1)
    ki = pl.program_id(2)

    @pl.when(ki == 0)
    def _():
        m_sc[...] = jnp.full_like(m_sc, _NEG_INF)
        l_sc[...] = jnp.zeros_like(l_sc)
        acc_sc[...] = jnp.zeros_like(acc_sc)

    # Skip kv blocks that are entirely above the causal diagonal.
    @pl.when(ki * block_kv <= qi * block_q + block_q - 1)
    def _():
        q = q_ref[...].astype(jnp.float32)   # (1, bq, D)
        k = k_ref[...].astype(jnp.float32)   # (1, bkv, D)
        v = v_ref[...].astype(jnp.float32)   # (1, bkv, D)
        s = jnp.einsum('bqd,bkd->bqk', q, k,
                       preferred_element_type=jnp.float32) * scale
        row = qi * block_q + jax.lax.broadcasted_iota(jnp.int32, s.shape, 1)
        col = ki * block_kv + jax.lax.broadcasted_iota(jnp.int32, s.shape, 2)
        s = jnp.where(col <= row, s, _NEG_INF)

        m_prev = m_sc[...]
        m_new = jnp.maximum(m_prev, s.max(axis=-1, keepdims=True))
        alpha = jnp.exp(m_prev - m_new)
        p = jnp.exp(s - m_new)
        l_sc[...] = alpha * l_sc[...] + p.sum(axis=-1, keepdims=True)
        acc_sc[...] = alpha * acc_sc[...] + jnp.einsum(
            'bqk,bkd->bqd', p, v, preferred_element_type=jnp.float32)
        m_sc[...] = m_new

    @pl.when(ki == pl.num_programs(2) - 1)
    def _():
        o_ref[...] = (acc_sc[...] / l_sc[...]).astype(o_ref.dtype)


def flash_attention_causal(q, k, v, *, block=256):
    """q, k, v: [B, H, S, D] (kv already repeated across query groups)."""
    B, H, S, D = q.shape
    scale = 1.0 / math.sqrt(D)
    blk = min(block, _round_up(S, 8))
    s_pad = _round_up(S, blk)
    if s_pad != S:
        pad = ((0, 0), (0, 0), (0, s_pad - S), (0, 0))
        q, k, v = (jnp.pad(t, pad) for t in (q, k, v))
    qf = q.reshape(B * H, s_pad, D)
    kf = k.reshape(B * H, s_pad, D)
    vf = v.reshape(B * H, s_pad, D)

    grid = (B * H, s_pad // blk, s_pad // blk)
    out = pl.pallas_call(
        functools.partial(_flash_kernel, scale=scale, block_q=blk, block_kv=blk),
        out_shape=jax.ShapeDtypeStruct((B * H, s_pad, D), q.dtype),
        grid_spec=pltpu.PrefetchScalarGridSpec(
            num_scalar_prefetch=0,
            grid=grid,
            in_specs=[
                pl.BlockSpec((1, blk, D), lambda b, qi, ki: (b, qi, 0)),
                pl.BlockSpec((1, blk, D), lambda b, qi, ki: (b, ki, 0)),
                pl.BlockSpec((1, blk, D), lambda b, qi, ki: (b, ki, 0)),
            ],
            out_specs=pl.BlockSpec((1, blk, D), lambda b, qi, ki: (b, qi, 0)),
            scratch_shapes=[
                pltpu.VMEM((1, blk, 1), jnp.float32),
                pltpu.VMEM((1, blk, 1), jnp.float32),
                pltpu.VMEM((1, blk, D), jnp.float32),
            ],
        ),
        compiler_params=pltpu.CompilerParams(
            dimension_semantics=("parallel", "parallel", "arbitrary"),
        ),
    )(qf, kf, vf)
    return out.reshape(B, H, s_pad, D)[:, :, :S, :]


# ---------------------------------------------------------------------------
# RMSNorm kernel (subln / group_norm) — improved per performance review
# ---------------------------------------------------------------------------
def _rmsnorm_kernel(x_ref, w_ref, o_ref, *, eps):
    x = x_ref[...].astype(jnp.float32)
    ms = jnp.mean(x * x, axis=-1, keepdims=True)
    inv = jax.lax.rsqrt(ms + eps)
    w = w_ref[...].astype(jnp.float32)
    # Keep everything in f32 and cast exactly once at the end.
    o_ref[...] = (x * inv * w).astype(o_ref.dtype)


def rmsnorm(x, weight, *, eps=1e-6, tile_rows=None):
    """RMSNorm over the last axis, then * weight. Output dtype = promote(x, weight)."""
    orig_shape = x.shape
    dim = orig_shape[-1]
    rows = math.prod(orig_shape[:-1]) if len(orig_shape) > 1 else 1
    x2 = x.reshape(rows, dim)
    out_dtype = jnp.promote_types(x.dtype, weight.dtype)
    w2 = weight.reshape(1, dim)

    in_isz = x2.dtype.itemsize
    out_isz = jnp.dtype(out_dtype).itemsize
    # Sublane packing: 8 rows (32-bit), 16 (bf16), 32 (int8/fp8).
    align = max(8, 32 // max(1, min(in_isz, out_isz)))

    if tile_rows is None:
        # Largest tile keeping double-buffered in+out tiles well inside scoped VMEM
        # (conservative enough for v7x's 64 MiB VMEM per TC).
        budget_per_buffer = 6 * 1024 * 1024
        tile_rows = max(align, min(1024, budget_per_buffer // max(1, dim * max(in_isz, out_isz))))
    tile_rows = max(align, (tile_rows // align) * align)
    tile_rows = min(tile_rows, _round_up(rows, align))

    rows_pad = _round_up(rows, tile_rows)
    if rows_pad != rows:
        x2 = jnp.pad(x2, ((0, rows_pad - rows), (0, 0)))

    grid = (rows_pad // tile_rows,)
    needed = 2 * tile_rows * dim * (in_isz + out_isz) + dim * 4
    vmem_limit = int(min(64 * 2**20, max(32 * 2**20, int(needed * 1.5))))

    out = pl.pallas_call(
        functools.partial(_rmsnorm_kernel, eps=eps),
        out_shape=jax.ShapeDtypeStruct((rows_pad, dim), out_dtype),
        grid_spec=pltpu.PrefetchScalarGridSpec(
            num_scalar_prefetch=0,
            grid=grid,
            in_specs=[
                pl.BlockSpec((tile_rows, dim), lambda i: (i, 0)),
                pl.BlockSpec((1, dim), lambda i: (0, 0)),
            ],
            out_specs=pl.BlockSpec((tile_rows, dim), lambda i: (i, 0)),
        ),
        compiler_params=pltpu.CompilerParams(
            dimension_semantics=("parallel",),
            vmem_limit_bytes=vmem_limit,
        ),
    )(x2, w2)
    if rows_pad != rows:
        out = out[:rows]
    return out.reshape(*orig_shape[:-1], dim)


# ---------------------------------------------------------------------------
# RoPE + full forward
# ---------------------------------------------------------------------------
def precompute_freqs_cis(head_dim, seq_len, theta):
    freqs = 1.0 / (theta ** (jnp.arange(0, head_dim, 2, dtype=jnp.float32) / head_dim))
    t = jnp.arange(seq_len, dtype=jnp.float32)
    angles = jnp.outer(t, freqs)  # [seq, head_dim // 2]
    return jnp.cos(angles), jnp.sin(angles)


def apply_rotary_emb(x, cos, sin):
    """x: [B, S, H, D]; cos/sin: [S, D//2]; adjacent-pair (complex) RoPE."""
    xr = x.astype(jnp.float32).reshape(*x.shape[:-1], -1, 2)
    x0, x1 = xr[..., 0], xr[..., 1]
    c = cos[None, :, None, :]
    s = sin[None, :, None, :]
    out = jnp.stack([x0 * c - x1 * s, x0 * s + x1 * c], axis=-1)
    return out.reshape(x.shape).astype(x.dtype)


def attention_forward(params, x, cos, sin, *, n_heads, n_kv_heads, head_dim,
                      group_norm=False, subln_eps=1e-5):
    """Attention.forward with use_mta=False, attn_impl='sdpa', mask='causal', dropout=0."""
    B, S, _ = x.shape
    xq = linear(x, params["wq"]).reshape(B, S, n_heads, head_dim)
    xk = linear(x, params["wk"]).reshape(B, S, n_kv_heads, head_dim)
    xv = linear(x, params["wv"]).reshape(B, S, n_kv_heads, head_dim)

    xq = apply_rotary_emb(xq, cos, sin)
    xk = apply_rotary_emb(xk, cos, sin)

    rep = n_heads // n_kv_heads                      # repeat_kv for GQA
    xk = jnp.repeat(xk, rep, axis=2)
    xv = jnp.repeat(xv, rep, axis=2)

    q = jnp.swapaxes(xq, 1, 2)                       # [B, H, S, D]
    k = jnp.swapaxes(xk, 1, 2)
    v = jnp.swapaxes(xv, 1, 2)

    out = flash_attention_causal(q, k, v)            # [B, H, S, D]
    out = jnp.swapaxes(out, 1, 2)                    # [B, S, H, D]

    if group_norm:
        out = rmsnorm(out, params["subln_weight"], eps=subln_eps)

    out = out.reshape(B, S, n_heads * head_dim)
    return linear(out, params["wo"])


# ---------------------------------------------------------------------------
# Pure-JAX reference
# ---------------------------------------------------------------------------
def attention_ref(params, x, cos, sin, *, n_heads, n_kv_heads, head_dim,
                  group_norm=False, subln_eps=1e-5):
    B, S, _ = x.shape
    xq = (x @ params["wq"].T).reshape(B, S, n_heads, head_dim)
    xk = (x @ params["wk"].T).reshape(B, S, n_kv_heads, head_dim)
    xv = (x @ params["wv"].T).reshape(B, S, n_kv_heads, head_dim)
    xq = apply_rotary_emb(xq, cos, sin)
    xk = apply_rotary_emb(xk, cos, sin)
    rep = n_heads // n_kv_heads
    xk = jnp.repeat(xk, rep, axis=2)
    xv = jnp.repeat(xv, rep, axis=2)
    q, k, v = (jnp.swapaxes(t, 1, 2) for t in (xq, xk, xv))
    scores = jnp.einsum('bhqd,bhkd->bhqk', q, k).astype(jnp.float32) / math.sqrt(head_dim)
    causal = jnp.tril(jnp.ones((S, S), dtype=bool))
    scores = jnp.where(causal[None, None], scores, -jnp.inf)
    p = jax.nn.softmax(scores, axis=-1).astype(q.dtype)
    out = jnp.einsum('bhqk,bhkd->bhqd', p, v)
    out = jnp.swapaxes(out, 1, 2)
    if group_norm:
        of = out.astype(jnp.float32)
        of = of * jax.lax.rsqrt(jnp.mean(of * of, axis=-1, keepdims=True) + subln_eps)
        out = of.astype(out.dtype) * params["subln_weight"]
    out = out.reshape(B, S, n_heads * head_dim)
    return out @ params["wo"].T


if __name__ == "__main__":
    key = jax.random.PRNGKey(0)
    bsz, seq_len, dim = 2, 8, 32
    n_heads, n_kv_heads, head_dim = 2, 1, 16
    rope_theta = 10000.0
    init_std = dim ** -0.5

    k1, k2, k3, k4, k5 = jax.random.split(key, 5)
    params = {
        "wq": jax.random.normal(k1, (n_heads * head_dim, dim), jnp.float32) * init_std,
        "wk": jax.random.normal(k2, (n_kv_heads * head_dim, dim), jnp.float32) * init_std,
        "wv": jax.random.normal(k3, (n_kv_heads * head_dim, dim), jnp.float32) * init_std,
        "wo": jax.random.normal(k4, (dim, n_heads * head_dim), jnp.float32) * init_std,
        "subln_weight": jnp.ones((head_dim,), jnp.float32),   # RMSNorm init: ones
    }
    x = jax.random.normal(k5, (bsz, seq_len, dim), dtype=jnp.float32)
    cos, sin = precompute_freqs_cis(head_dim, seq_len, rope_theta)

    out = attention_forward(params, x, cos, sin,
                            n_heads=n_heads, n_kv_heads=n_kv_heads,
                            head_dim=head_dim, group_norm=True, subln_eps=1e-5)
    out = jax.block_until_ready(out)

    ref = attention_ref(params, x, cos, sin,
                        n_heads=n_heads, n_kv_heads=n_kv_heads,
                        head_dim=head_dim, group_norm=True, subln_eps=1e-5)
    assert out.shape == (bsz, seq_len, dim)
    assert jnp.allclose(out, ref, atol=2e-2, rtol=2e-2), float(jnp.max(jnp.abs(out - ref)))
    print("KERNEL_OK")
</pallas_src>

<mosaic_0001>
module attributes {stable_mosaic.version = 11 : i64} {
  func.func @_linear_kernel(%arg0: i32, %arg1: i32, %arg2: i32, %arg3: memref<16x32xf32, #tpu.memory_space<vmem>>, %arg4: memref<32x32xf32, #tpu.memory_space<vmem>>, %arg5: memref<16x32xf32, #tpu.memory_space<vmem>>, %arg6: memref<16x32xf32, #tpu.memory_space<vmem>>) attributes {dimension_semantics = [#tpu.dimension_semantics<parallel>, #tpu.dimension_semantics<parallel>, #tpu.dimension_semantics<arbitrary>], iteration_bounds = array<i64: 1, 1, 1>, scalar_prefetch = 0 : i64, scratch_operands = 1 : i64, tpu.core_type = #tpu.core_type<tc>, window_params = [{transform_indices = @transform_0, window_bounds = array<i64: 16, 32>}, {transform_indices = @transform_1, window_bounds = array<i64: 32, 32>}, {transform_indices = @transform_2, window_bounds = array<i64: 16, 32>}]} {
    %c0_i32 = arith.constant 0 : i32
    %0 = arith.cmpi eq, %arg2, %c0_i32 : i32
    %1 = arith.extui %0 : i1 to i32
    %c0_i32_0 = arith.constant 0 : i32
    %2 = arith.cmpi ne, %1, %c0_i32_0 : i32
    scf.if %2 {
      %cst_10 = arith.constant 0.000000e+00 : f32
      %12 = vector.broadcast %cst_10 : f32 to vector<16x32xf32>
      %c0_11 = arith.constant 0 : index
      %c0_12 = arith.constant 0 : index
      %13 = vector.load %arg6[%c0_11, %c0_12] : memref<16x32xf32, #tpu.memory_space<vmem>>, vector<16x32xf32>
      tpu.vector_store %arg6[%c0_11, %c0_12], %12 {strides = array<i32>} : memref<16x32xf32, #tpu.memory_space<vmem>>, vector<16x32xf32>,
    } else {
    }
    %c0 = arith.constant 0 : index
    %c0_1 = arith.constant 0 : index
    %3 = vector.load %arg6[%c0, %c0_1] : memref<16x32xf32, #tpu.memory_space<vmem>>, vector<16x32xf32>
    %c0_2 = arith.constant 0 : index
    %c0_3 = arith.constant 0 : index
    %4 = vector.load %arg3[%c0_2, %c0_3] : memref<16x32xf32, #tpu.memory_space<vmem>>, vector<16x32xf32>
    %c0_4 = arith.constant 0 : index
    %c0_5 = arith.constant 0 : index
    %5 = vector.load %arg4[%c0_4, %c0_5] : memref<32x32xf32, #tpu.memory_space<vmem>>, vector<32x32xf32>
    %cst = arith.constant dense<0.000000e+00> : vector<16x32xf32>
    %6 = tpu.matmul %4, %5, %cst {dimension_numbers = #tpu.dot_dimension_numbers<[1], [0], [0], [1], [0, 0, 1, 1], [], []>} : vector<16x32xf32>, vector<32x32xf32>, vector<16x32xf32> -> vector<16x32xf32>
    %7 = arith.addf %3, %6 : vector<16x32xf32>
    %c0_6 = arith.constant 0 : index
    %c0_7 = arith.constant 0 : index
    %8 = vector.load %arg6[%c0_6, %c0_7] : memref<16x32xf32, #tpu.memory_space<vmem>>, vector<16x32xf32>
    tpu.vector_store %arg6[%c0_6, %c0_7], %7 {strides = array<i32>} : memref<16x32xf32, #tpu.memory_space<vmem>>, vector<16x32xf32>,
    %c0_i32_8 = arith.constant 0 : i32
    %9 = arith.cmpi eq, %arg2, %c0_i32_8 : i32
    %10 = arith.extui %9 : i1 to i32
    %c0_i32_9 = arith.constant 0 : i32
    %11 = arith.cmpi ne, %10, %c0_i32_9 : i32
    scf.if %11 {
      %c0_10 = arith.constant 0 : index
      %c0_11 = arith.constant 0 : index
      %12 = vector.load %arg6[%c0_10, %c0_11] : memref<16x32xf32, #tpu.memory_space<vmem>>, vector<16x32xf32>
      %c0_12 = arith.constant 0 : index
      %c0_13 = arith.constant 0 : index
      %13 = vector.load %arg5[%c0_12, %c0_13] : memref<16x32xf32, #tpu.memory_space<vmem>>, vector<16x32xf32>
      tpu.vector_store %arg5[%c0_12, %c0_13], %12 {strides = array<i32>} : memref<16x32xf32, #tpu.memory_space<vmem>>, vector<16x32xf32>,
    } else {
    }
    return
  }
  func.func @transform_0(%arg0: i32, %arg1: i32, %arg2: i32) -> (i32, i32) {
    %c0_i32 = arith.constant 0 : i32
    return %arg0, %arg2 : i32, i32
  }
  func.func @transform_1(%arg0: i32, %arg1: i32, %arg2: i32) -> (i32, i32) {
    %c0_i32 = arith.constant 0 : i32
    return %arg2, %arg1 : i32, i32
  }
  func.func @transform_2(%arg0: i32, %arg1: i32, %arg2: i32) -> (i32, i32) {
    %c0_i32 = arith.constant 0 : i32
    return %arg0, %arg1 : i32, i32
  }
}

</mosaic_0001>

<llo_original>
// kernel: tpu_custom_call.1
$region0: #{tpu_custom_call.1}
  #allocation0 [shape = 'u32[]', space=smem, size = 0x4, offset = 0x4, fixed_abs, tag = 'smem constant byte address 0x4 - core index']
  #allocation1 [shape = 'u32[144,128]{1,0:T(1,128)}', space=vmem, size = 0x12000, scoped, tag = 'internal scratch']
  #allocation2 [shape = 'f32[16,32]{1,0:T(8,128)}', space=vmem, size = 0x2000, scoped, tag = 'scratch operand']
  %s0 = inlined_call_operand.hbm [shape: f32[16,32], index: 0, kind: input, shape index: {}]
  %s1 = inlined_call_operand.hbm [shape: f32[32,32], index: 1, kind: input, shape index: {}]
  %s2 = inlined_call_operand.hbm [shape: f32[16,32], index: 2, kind: output, shape index: {}]
  %s3 = sld [smem:[#allocation0]]
  $region34: #{tpu_custom_call.1} parent=0
    _
  %s5 = ssub.s32 1, %s3
  %s6 = scalar_select 0, %s5, %s3
  $region1: #{tpu_custom_call.1} parent=0
    #allocation3 [shape = 'u8[8192]{0}', space=vmem, size = 0x2000, scoped, tag = 'input window, operand 0, single buffered']
    #allocation4 [shape = 's32[1]{0}', space=sflag, size = 0x4, scoped, tag = 'scoped memory for tpu_custom_call.1']
    #allocation5 [shape = 's32[1]{0}', space=sflag, size = 0x4, scoped, tag = 'scoped memory for tpu_custom_call.1']
    #allocation6 [shape = 'u8[16384]{0}', space=vmem, size = 0x4000, scoped, tag = 'input window, operand 1, single buffered']
    #allocation7 [shape = 's32[1]{0}', space=sflag, size = 0x4, scoped, tag = 'scoped memory for tpu_custom_call.1']
    #allocation8 [shape = 'u8[8192]{0}', space=vmem, size = 0x2000, scoped, tag = 'output window, operand 0, single buffered']
    %7 = vsyncpa [#allocation4], 0
    %8 = vsyncpa [#allocation7], 0
    %9 = vsyncpa [#allocation5], 0
    // Predicated region
    $region2: #{tpu_custom_call.1} parent=1 // pred_check
      _
    $region3: #{tpu_custom_call.1} parent=1 // pred_check_branch
      %11 = sbr.rel (0) target = $region5
    $region4: #{tpu_custom_call.1} parent=1 // pred_region
      %s13 = ssub.s32 256, 256
      %14 = vsyncadd [#allocation4], %s13
      %s15 = sshll.u32 [#allocation3], 4
      %s16 = int_to_ptr.vmem [resolvable:$true] %s15
      %21 = dma.hbm_to_vmem [thread:$0]  %s0, 256, %s16, [#allocation4], 128, 128, 8
    $region5: #{tpu_custom_call.1} parent=1 // pred_fallthru
      _
    // Predicated region
    $region6: #{tpu_custom_call.1} parent=1 // pred_check
      _
    $region7: #{tpu_custom_call.1} parent=1 // pred_check_branch
      %23 = sbr.rel (0) target = $region9
    $region8: #{tpu_custom_call.1} parent=1 // pred_region
      %s25 = ssub.s32 512, 512
      %26 = vsyncadd [#allocation7], %s25
      %s27 = sshll.u32 [#allocation6], 4
      %s28 = int_to_ptr.vmem [resolvable:$true] %s27
      %33 = dma.hbm_to_vmem [thread:$0]  %s1, 512, %s28, [#allocation7], 128, 128, 8
    $region9: #{tpu_custom_call.1} parent=1 // pred_fallthru
      _
    // Predicated region
    $region10: #{tpu_custom_call.1} parent=1 // pred_check
      _
    $region11: #{tpu_custom_call.1} parent=1 // pred_check_branch
      %35 = sbr.rel (0) target = $region13
    $region12: #{tpu_custom_call.1} parent=1 // pred_region
      %36 = dma.done [#allocation4], 256
    $region13: #{tpu_custom_call.1} parent=1 // pred_fallthru
      _
    // Predicated region
    $region14: #{tpu_custom_call.1} parent=1 // pred_check
      _
    $region15: #{tpu_custom_call.1} parent=1 // pred_check_branch
      %38 = sbr.rel (0) target = $region17
    $region16: #{tpu_custom_call.1} parent=1 // pred_region
      %39 = dma.done [#allocation7], 512
    $region17: #{tpu_custom_call.1} parent=1 // pred_fallthru
      _
    %p40 = scmp.eq.s32.totalorder 0, 0
    // Predicated region
    $region18: #{tpu_custom_call.1} parent=1 // pred_check
      %p41 = pneg %p40
    $region19: #{tpu_custom_call.1} parent=1 // pred_check_branch
      %43 = sbr.rel (%p41) target = $region21
    $region20: #{tpu_custom_call.1} parent=1 // pred_region
      %vm44 = vcmask 261120
      %45 = vst.msk [vmem:[#allocation2] sm:$0xff] %vm44, 0.0
      %46 = vst.msk [vmem:[#allocation2 + $0x8] sm:$0xff] %vm44, 0.0
    $region21: #{tpu_custom_call.1} parent=1 // pred_fallthru
      _
    %v47 = vld [vmem:[#allocation2] sm:$0xff]
    %v48 = vld [vmem:[#allocation2 + $0x8] sm:$0xff]
    %v49 = vld [vmem:[#allocation3] sm:$0xff]
    %v50 = vld [vmem:[#allocation3 + $0x8] sm:$0xff]
    %v51 = vld [vmem:[#allocation6] sm:$0xff]
    %v52 = vld [vmem:[#allocation6 + $0x8] sm:$0xff]
    %v53 = vld [vmem:[#allocation6 + $0x10] sm:$0xff]
    %v54 = vld [vmem:[#allocation6 + $0x18] sm:$0xff]
    %vm55 = vcmask 261120
    %v57 = vsel %vm55, %v49, 0
    %v60 = vsel %vm55, %v50, 0
    %62 = vmatprep.subr.mxu0 0.0
    %63 = vmatpush1.msra.mxu0 %v51
    %64 = vmatprep.subr.mxu0 0.0
    %65 = vmatpush1.msra.mxu0 %v52
    %66 = vmatprep.subr.mxu0 0.0
    %67 = vmatpush1.msra.mxu0 %v53
    %68 = vmatprep.subr.mxu0 0.0
    %69 = vmatpush1.msra.mxu0 %v54
    %70 = vmatprep.subr.mxu0 0.0
    %71 = vmatpush1.msra.mxu0 0.0
    %72 = vmatprep.subr.mxu0 0.0
    %73 = vmatpush1.msra.mxu0 0.0
    %74 = vmatprep.subr.mxu0 0.0
    %75 = vmatpush1.msra.mxu0 0.0
    %76 = vmatprep.subr.mxu0 0.0
    %77 = vmatpush1.msra.mxu0 0.0
    %78 = vmatprep.subr.mxu0 0.0
    %79 = vmatpush1.msra.mxu0 0.0
    %80 = vmatprep.subr.mxu0 0.0
    %81 = vmatpush1.msra.mxu0 0.0
    %82 = vmatprep.subr.mxu0 0.0
    %83 = vmatpush1.msra.mxu0 0.0
    %84 = vmatprep.subr.mxu0 0.0
    %85 = vmatpush1.msra.mxu0 0.0
    %86 = vmatprep.subr.mxu0 0.0
    %87 = vmatpush1.msra.mxu0 0.0
    %88 = vmatprep.subr.mxu0 0.0
    %89 = vmatpush1.msra.mxu0 0.0
    %90 = vmatprep.subr.mxu0 0.0
    %91 = vmatpush1.msra.mxu0 0.0
    %92 = vmatprep.subr.mxu0 0.0
    %93 = vmatpush1.msra.mxu0 0.0
    %94 = vmatprep.subr.mxu0 0.0
    %95 = vmatpush1.msra.mxu0 0.0
    %96 = vmatprep.subr.mxu0 0.0
    %97 = vmatpush1.msra.mxu0 0.0
    %98 = vmatprep.subr.mxu0 0.0
    %99 = vmatpush1.msra.mxu0 0.0
    %100 = vmatprep.subr.mxu0 0.0
    %101 = vmatpush1.msra.mxu0 0.0
    %102 = vmatprep.subr.mxu0 0.0
    %103 = vmatpush1.msra.mxu0 0.0
    %104 = vmatprep.subr.mxu0 0.0
    %105 = vmatpush1.msra.mxu0 0.0
    %106 = vmatprep.subr.mxu0 0.0
    %107 = vmatpush1.msra.mxu0 0.0
    %108 = vmatprep.subr.mxu0 0.0
    %109 = vmatpush1.msra.mxu0 0.0
    %110 = vmatprep.subr.mxu0 0.0
    %111 = vmatpush1.msra.mxu0 0.0
    %112 = vmatprep.subr.mxu0 0.0
    %113 = vmatpush1.msra.mxu0 0.0
    %114 = vmatprep.subr.mxu0 0.0
    %115 = vmatpush1.msra.mxu0 0.0
    %116 = vmatprep.subr.mxu0 0.0
    %117 = vmatpush1.msra.mxu0 0.0
    %118 = vmatprep.subr.mxu0 0.0
    %119 = vmatpush1.msra.mxu0 0.0
    %120 = vmatprep.subr.mxu0 0.0
    %121 = vmatpush1.msra.mxu0 0.0
    %122 = vmatprep.subr.mxu0 0.0
    %123 = vmatpush1.msra.mxu0 0.0
    %124 = vmatprep.subr.mxu0 0.0
    %125 = vmatpush1.msra.mxu0 0.0
    %126 = vmatprep.mubr.f32.mxu0 0.0
    %127 = vmatmul.mubr.f32.gmra.mrb[0].mxu0 %v57
    %v128 = vpop.f32.mrb[0].mxu0
    %v129 = vadd.f32 0.0, %v128
    %v130 = vpop.f32.mrb[0].mxu0
    %131 = vmatprep.mubr.f32.mxu0 0.0
    %132 = vmatmul.mubr.f32.gmra.mrb[0].mxu0 %v60
    %v133 = vpop.f32.mrb[0].mxu0
    %v134 = vadd.f32 0.0, %v133
    %v135 = vpop.f32.mrb[0].mxu0
    %136 = vdwg.mxu0
    %v137 = vadd.f32 %v47, %v129
    %v138 = vadd.f32 %v48, %v134
    %139 = vst.msk [vmem:[#allocation2] sm:$0xff] %vm55, %v137
    %140 = vst.msk [vmem:[#allocation2 + $0x8] sm:$0xff] %vm55, %v138
    // Predicated region
    $region22: #{tpu_custom_call.1} parent=1 // pred_check
      %p141 = pneg %p40
    $region23: #{tpu_custom_call.1} parent=1 // pred_check_branch
      %143 = sbr.rel (%p141) target = $region25
    $region24: #{tpu_custom_call.1} parent=1 // pred_region
      %v144 = vld [vmem:[#allocation2] sm:$0xff]
      %v145 = vld [vmem:[#allocation2 + $0x8] sm:$0xff]
      %146 = vst.msk [vmem:[#allocation8] sm:$0xff] %vm55, %v144
      %147 = vst.msk [vmem:[#allocation8 + $0x8] sm:$0xff] %vm55, %v145
    $region25: #{tpu_custom_call.1} parent=1 // pred_fallthru
      _
    // Predicated region
    $region26: #{tpu_custom_call.1} parent=1 // pred_check
      _
    $region27: #{tpu_custom_call.1} parent=1 // pred_check_branch
      %149 = sbr.rel (0) target = $region29
    $region28: #{tpu_custom_call.1} parent=1 // pred_region
      %s151 = ssub.s32 256, 256
      %152 = vsyncadd [#allocation5], %s151
      %s153 = sshll.u32 [#allocation8], 4
      %s154 = int_to_ptr.vmem [resolvable:$true] %s153
      %159 = dma.vmem_to_hbm [thread:$0]  %s154, 256, %s2, [#allocation5], 128, 128, 8
    $region29: #{tpu_custom_call.1} parent=1 // pred_fallthru
      _
    // Predicated region
    $region30: #{tpu_custom_call.1} parent=1 // pred_check
      _
    $region31: #{tpu_custom_call.1} parent=1 // pred_check_branch
      %161 = sbr.rel (0) target = $region33
    $region32: #{tpu_custom_call.1} parent=1 // pred_region
      %162 = dma.done [#allocation5], 256
    $region33: #{tpu_custom_call.1} parent=1 // pred_fallthru
      _
    %163 = vsyncpa [#allocation4], 1
    %164 = vsyncpa [#allocation7], 1
    %165 = vsyncpa [#allocation5], 1

</llo_original>
